<compile_context>
chip_gen: v7x
topology: tpu7x:2x2x1
jax: 0.10.0
libtpu: 0.0.40
codegen_flags: <defaults>
</compile_context>

<pallas_src>
import functools

import jax
import jax.numpy as jnp
from jax import lax
from jax.experimental import pallas as pl
from jax.experimental.pallas import tpu as pltpu


# ----------------------------- Pallas kernel -----------------------------

def _group_bn_kernel(x_ref, o_ref, *, eps):
    # x_ref / o_ref: (B, 1, dim_rep, H*W)  — one full rep-group, resident in VMEM.
    x = x_ref[...].astype(jnp.float32)
    count = x.shape[0] * x.shape[2] * x.shape[3]          # static python int
    inv_count = jnp.float32(1.0 / count)

    mean = jnp.sum(x) * inv_count                         # scalar, f32
    xc = x - mean
    var = jnp.sum(xc * xc) * inv_count                    # biased variance (torch BN)
    rstd = lax.rsqrt(var + jnp.float32(eps))              # EUP, effectively free

    o_ref[...] = (xc * rstd).astype(o_ref.dtype)


# ----------------------------- Module wrapper -----------------------------

@functools.partial(jax.jit, static_argnames=("num_rep", "dim_rep", "eps"))
def group_batch_norm_forward(x, num_rep, dim_rep, eps=1e-5):
    """x: (B, num_rep*dim_rep, H, W) -> same shape, normalized per rep-group."""
    B, C, H, W = x.shape
    assert C == num_rep * dim_rep, "channel dim must equal num_rep * dim_rep"
    G = H * W

    # Free contiguous reshape: no transpose, no copy.
    xg = x.reshape(B, num_rep, dim_rep, G)

    yg = pl.pallas_call(
        functools.partial(_group_bn_kernel, eps=eps),
        out_shape=jax.ShapeDtypeStruct((B, num_rep, dim_rep, G), x.dtype),
        grid_spec=pltpu.PrefetchScalarGridSpec(
            num_scalar_prefetch=0,
            grid=(num_rep,),
            in_specs=[
                # Last two block dims equal the full array dims (dim_rep, H*W),
                # so this is legal for any dim_rep / H / W and lane-dense.
                pl.BlockSpec((B, 1, dim_rep, G), lambda g: (0, g, 0, 0)),
            ],
            out_specs=pl.BlockSpec((B, 1, dim_rep, G), lambda g: (0, g, 0, 0)),
        ),
        compiler_params=pltpu.CompilerParams(
            # Groups are independent -> shard across the 2 TCs on v7x.
            dimension_semantics=("parallel",),
        ),
    )(xg)

    return yg.reshape(B, C, H, W)


# ----------------------------- Demo / check -----------------------------

if __name__ == "__main__":
    # Small shapes: C = num_rep * dim_rep = 2 * 4 = 8.
    B, num_rep, dim_rep, H, W = 2, 2, 4, 16, 16
    C = num_rep * dim_rep
    eps = 1e-5

    key = jax.random.PRNGKey(0)
    x = jax.random.normal(key, (B, C, H, W), dtype=jnp.float32) * 1.7 + 0.3

    y = group_batch_norm_forward(x, num_rep, dim_rep, eps)
    y = jax.block_until_ready(y)

    # Pure-JAX reference (training-mode BatchNorm3d over the grouped view).
    xr = x.reshape(B, num_rep, dim_rep, H, W)
    mean = xr.mean(axis=(0, 2, 3, 4), keepdims=True)
    var = ((xr - mean) ** 2).mean(axis=(0, 2, 3, 4), keepdims=True)   # biased
    y_ref = ((xr - mean) * lax.rsqrt(var + eps)).reshape(B, C, H, W)

    assert y.shape == x.shape
    assert jnp.allclose(y, y_ref, atol=1e-5, rtol=1e-5), float(
        jnp.max(jnp.abs(y - y_ref))
    )

    print("KERNEL_OK")
</pallas_src>

<mosaic_0001>
module attributes {stable_mosaic.version = 11 : i64} {
  func.func @_group_bn_kernel(%arg0: i32, %arg1: memref<2x1x4x256xf32, #tpu.memory_space<vmem>>, %arg2: memref<2x1x4x256xf32, #tpu.memory_space<vmem>>) attributes {dimension_semantics = [#tpu.dimension_semantics<parallel>], iteration_bounds = array<i64: 2>, scalar_prefetch = 0 : i64, scratch_operands = 0 : i64, tpu.core_type = #tpu.core_type<tc>, window_params = [{transform_indices = @transform_0, window_bounds = array<i64: 2, 1, 4, 256>}, {transform_indices = @transform_1, window_bounds = array<i64: 2, 1, 4, 256>}]} {
    %c0 = arith.constant 0 : index
    %c0_0 = arith.constant 0 : index
    %c0_1 = arith.constant 0 : index
    %c0_2 = arith.constant 0 : index
    %0 = vector.load %arg1[%c0, %c0_0, %c0_1, %c0_2] : memref<2x1x4x256xf32, #tpu.memory_space<vmem>>, vector<2x1x4x256xf32>
    %1 = vector.shape_cast %0 : vector<2x1x4x256xf32> to vector<1x2x1x4x256xf32>
    %cst = arith.constant dense<0.000000e+00> : vector<1xf32>
    %2 = vector.multi_reduction <add>, %1, %cst [1, 2, 3, 4] : vector<1x2x1x4x256xf32> to vector<1xf32>
    %3 = vector.shape_cast %2 : vector<1xf32> to vector<1x1x1x1x1xf32>
    %4 = vector.extract %3[0, 0, 0, 0, 0] : f32 from vector<1x1x1x1x1xf32>
    %cst_3 = arith.constant 4.8828125E-4 : f32
    %5 = arith.mulf %4, %cst_3 : f32
    %6 = vector.broadcast %5 : f32 to vector<2x1x4x256xf32>
    %7 = arith.subf %0, %6 : vector<2x1x4x256xf32>
    %8 = arith.mulf %7, %7 : vector<2x1x4x256xf32>
    %9 = vector.shape_cast %8 : vector<2x1x4x256xf32> to vector<1x2x1x4x256xf32>
    %cst_4 = arith.constant dense<0.000000e+00> : vector<1xf32>
    %10 = vector.multi_reduction <add>, %9, %cst_4 [1, 2, 3, 4] : vector<1x2x1x4x256xf32> to vector<1xf32>
    %11 = vector.shape_cast %10 : vector<1xf32> to vector<1x1x1x1x1xf32>
    %12 = vector.extract %11[0, 0, 0, 0, 0] : f32 from vector<1x1x1x1x1xf32>
    %cst_5 = arith.constant 4.8828125E-4 : f32
    %13 = arith.mulf %12, %cst_5 : f32
    %cst_6 = arith.constant 9.99999974E-6 : f32
    %14 = arith.addf %13, %cst_6 : f32
    %15 = math.rsqrt %14 : f32
    %16 = vector.broadcast %15 : f32 to vector<2x1x4x256xf32>
    %17 = arith.mulf %7, %16 : vector<2x1x4x256xf32>
    %c0_7 = arith.constant 0 : index
    %c0_8 = arith.constant 0 : index
    %c0_9 = arith.constant 0 : index
    %c0_10 = arith.constant 0 : index
    %18 = vector.load %arg2[%c0_7, %c0_8, %c0_9, %c0_10] : memref<2x1x4x256xf32, #tpu.memory_space<vmem>>, vector<2x1x4x256xf32>
    tpu.vector_store %arg2[%c0_7, %c0_8, %c0_9, %c0_10], %17 {strides = array<i32>} : memref<2x1x4x256xf32, #tpu.memory_space<vmem>>, vector<2x1x4x256xf32>,
    return
  }
  func.func @transform_0(%arg0: i32) -> (i32, i32, i32, i32) {
    %c0_i32 = arith.constant 0 : i32
    %c0_i32_0 = arith.constant 0 : i32
    %c0_i32_1 = arith.constant 0 : i32
    %c0_i32_2 = arith.constant 0 : i32
    return %c0_i32, %arg0, %c0_i32_0, %c0_i32_1 : i32, i32, i32, i32
  }
  func.func @transform_1(%arg0: i32) -> (i32, i32, i32, i32) {
    %c0_i32 = arith.constant 0 : i32
    %c0_i32_0 = arith.constant 0 : i32
    %c0_i32_1 = arith.constant 0 : i32
    %c0_i32_2 = arith.constant 0 : i32
    return %c0_i32, %arg0, %c0_i32_0, %c0_i32_1 : i32, i32, i32, i32
  }
}

</mosaic_0001>

<llo_original>
// kernel: group_batch_norm_forward.1
$region0: #{group_batch_norm_forward.1}
  #allocation0 [shape = 'u32[]', space=smem, size = 0x4, offset = 0x4, fixed_abs, tag = 'smem constant byte address 0x4 - core index']
  #allocation1 [shape = 'u32[144,128]{1,0:T(1,128)}', space=vmem, size = 0x12000, scoped, tag = 'internal scratch']
  %s0 = inlined_call_operand.vmem [shape: f32[2,2,4,256], index: 0, kind: input, shape index: {}]
  %s1 = inlined_call_operand.vmem [shape: f32[2,2,4,256], index: 1, kind: output, shape index: {}]
  %s2 = sld [smem:[#allocation0]]
  $region109: #{group_batch_norm_forward.1} parent=0
    _
  %s4 = ssub.s32 1, %s2
  %s5 = scalar_select 0, %s4, %s2
  $region1: #{group_batch_norm_forward.1} parent=0
    #allocation2 [shape = 'u8[16384]{0}', space=vmem, size = 0x4000, scoped, tag = 'input window, operand 0']
    #allocation3 [shape = 'u8[16384]{0}', space=vmem, size = 0x4000, scoped, tag = 'output window, operand 0']
    loop: start=0, step=1, limit=4
    $region2: #{group_batch_norm_forward.1} parent=1 // loop_pre_header
      _
    $region3: #{group_batch_norm_forward.1} parent=1 // loop_header
      %s7 = sphi 0, %s11
      %p8 = scmp.ge.s32.totalorder %s7, 4
      %s17 = sphi 0, %s19
      %s20 = sphi 0, %s17
      %s21 = sphi 0, %s20
      %s37 = sphi 0, %s21
      %s43 = sphi 0, %s45
      %s46 = sphi 0, %s43
      %s47 = sphi 0, %s46
      %s63 = sphi 0, %s47
    $region4: #{group_batch_norm_forward.1} parent=1 // loop_header_branch
      %10 = sbr.rel (%p8) target = $region8
    $region5: #{group_batch_norm_forward.1} parent=1 // loop_body
      %s12 = ssub.s32 %s7, 1
      %s13 = ssub.s32 %s7, 2
      %s14 = sadd.s32 %s7, 1
      %s15 = ssub.s32 %s7, %s14
      %p16 = scmp.eq.s32.totalorder %s15, 0
      %s18 = sadd.s32 %s17, 1
      %s19 = scalar_select %p16, %s17, %s18
      %p22 = pneg %p16
      %p23 = scmp.eq.s32.totalorder %s7, 1
      %p24 = por %p22, %p23
      %p25 = scmp.ne.s32.totalorder %s17, %s20
      %p26 = scmp.eq.s32.totalorder %s7, 0
      %p27 = por %p25, %p26
      %p28 = scmp.ne.s32.totalorder %s17, %s20
      %p29 = scmp.eq.s32.totalorder %s12, 1
      %p30 = por %p28, %p29
      %p31 = scmp.ne.s32.totalorder %s20, %s21
      %p32 = scmp.eq.s32.totalorder %s12, 0
      %p33 = por %p31, %p32
      %p34 = scmp.ne.s32.totalorder %s20, %s21
      %p35 = scmp.eq.s32.totalorder %s13, 1
      %p36 = por %p34, %p35
      %p38 = scmp.ne.s32.totalorder %s21, %s37
      %p39 = scmp.eq.s32.totalorder %s13, 0
      %p40 = por %p38, %p39
      %s41 = ssub.s32 %s7, %s14
      %p42 = scmp.eq.s32.totalorder %s41, 0
      %s44 = sadd.s32 %s43, 1
      %s45 = scalar_select %p42, %s43, %s44
      %p48 = pneg %p42
      %p49 = scmp.eq.s32.totalorder %s7, 1
      %p50 = por %p48, %p49
      %p51 = scmp.ne.s32.totalorder %s43, %s46
      %p52 = scmp.eq.s32.totalorder %s7, 0
      %p53 = por %p51, %p52
      %p54 = scmp.ne.s32.totalorder %s43, %s46
      %p55 = scmp.eq.s32.totalorder %s12, 1
      %p56 = por %p54, %p55
      %p57 = scmp.ne.s32.totalorder %s46, %s47
      %p58 = scmp.eq.s32.totalorder %s12, 0
      %p59 = por %p57, %p58
      %p60 = scmp.ne.s32.totalorder %s46, %s47
      %p61 = scmp.eq.s32.totalorder %s13, 1
      %p62 = por %p60, %p61
      %p64 = scmp.ne.s32.totalorder %s47, %s63
      %p65 = scmp.eq.s32.totalorder %s13, 0
      %p66 = por %p64, %p65
      %p67 = scmp.le.s32.totalorder 1, %s7
      %p68 = scmp.lt.s32.totalorder %s7, 3
      %p69 = pnand %p67, %p68
      %p70 = pneg %p69
      // Predicated region
      $region9: #{group_batch_norm_forward.1} parent=5 // pred_check
        _
      $region10: #{group_batch_norm_forward.1} parent=5 // pred_check_branch
        %72 = sbr.rel (%p69) target = $region12
      $region11: #{group_batch_norm_forward.1} parent=5 // pred_region
        %s73 = ssub.s32 %s7, 1
      $region12: #{group_batch_norm_forward.1} parent=5 // pred_fallthru
        _
      %p74 = scmp.lt.s32.totalorder %s7, 2
      // Predicated region
      $region13: #{group_batch_norm_forward.1} parent=5 // pred_check
        %p75 = pneg %p74
      $region14: #{group_batch_norm_forward.1} parent=5 // pred_check_branch
        %77 = sbr.rel (%p75) target = $region16
      $region15: #{group_batch_norm_forward.1} parent=5 // pred_region
        // Predicated region
        $region17: #{group_batch_norm_forward.1} parent=15 // pred_check
          %p78 = pneg %p27
        $region18: #{group_batch_norm_forward.1} parent=15 // pred_check_branch
          %80 = sbr.rel (%p78) target = $region20
        $region19: #{group_batch_norm_forward.1} parent=15 // pred_region
          %s81 = sand.u32 %s17, 1
          %s82 = sand.u32 %s17, 1
          %s83 = smul.addr %s82, 16
          %s84 = scalar_lea.vmem [#allocation2], %s83
          %s85 = smul.addr %s7, 2
          %s86 = smul.addr %s85, 4
          %s87 = scalar_lea.vmem %s0, %s86
          // Predicated region
          $region21: #{group_batch_norm_forward.1} parent=19 // pred_check
            _
          $region22: #{group_batch_norm_forward.1} parent=19 // pred_check_branch
            %89 = sbr.rel (0) target = $region24
          $region23: #{group_batch_norm_forward.1} parent=19 // pred_region
            // Predicated region
            $region25: #{group_batch_norm_forward.1} parent=23 // pred_check
              _
            $region26: #{group_batch_norm_forward.1} parent=23 // pred_check_branch
              %91 = sbr.rel (0) target = $region28
            $region27: #{group_batch_norm_forward.1} parent=23 // pred_region
              // Predicated region
              $region40: #{group_batch_norm_forward.1} parent=27 // pred_check
                _
              $region41: #{group_batch_norm_forward.1} parent=27 // pred_check_branch
                %108 = sbr.rel (0) target = $region43
              $region42: #{group_batch_norm_forward.1} parent=27 // pred_region
                loop: start=0, step=1, limit=1
                $region44: #{group_batch_norm_forward.1} parent=42 // loop_pre_header
                  _
                $region45: #{group_batch_norm_forward.1} parent=42 // loop_header
                  %s110 = sphi 0, %s114
                  %p111 = scmp.ge.s32.totalorder %s110, 1
                  %s115 = sphi %s87, %s87
                  %s116 = sphi %s84, %s84
                $region46: #{group_batch_norm_forward.1} parent=42 // loop_header_branch
                  %113 = sbr.rel (%p111) target = $region50
                $region47: #{group_batch_norm_forward.1} parent=42 // loop_body
                  %v117 = vld [vmem:[%s115] sm:$0xff]
                  %118 = vst [vmem:[%s116] sm:$0xff] %v117
                  %v119 = vld [vmem:[%s115 + $0x10] sm:$0xff]
                  %120 = vst [vmem:[%s116 + $0x8] sm:$0xff] %v119
                $region48: #{group_batch_norm_forward.1} parent=42 // loop_footer
                  %s114 = sadd.s32 1, %s110
                $region49: #{group_batch_norm_forward.1} parent=42 // loop_footer_branch
                  %109 = sbr.rel target = $region45
                $region50: #{group_batch_norm_forward.1} parent=42 // loop_exit
                  _
              $region43: #{group_batch_norm_forward.1} parent=27 // pred_fallthru
                _
              // Predicated region
              $region51: #{group_batch_norm_forward.1} parent=27 // pred_check
                _
              $region52: #{group_batch_norm_forward.1} parent=27 // pred_check_branch
                %122 = sbr.rel target = $region54
              $region53: #{group_batch_norm_forward.1} parent=27 // pred_region
                _
              $region54: #{group_batch_norm_forward.1} parent=27 // pred_fallthru
                _
            $region28: #{group_batch_norm_forward.1} parent=23 // pred_fallthru
              _
            // Predicated region
            $region29: #{group_batch_norm_forward.1} parent=23 // pred_check
              _
            $region30: #{group_batch_norm_forward.1} parent=23 // pred_check_branch
              %93 = sbr.rel target = $region32
            $region31: #{group_batch_norm_forward.1} parent=23 // pred_region
              loop: start=0, step=1, limit=1
              $region33: #{group_batch_norm_forward.1} parent=31 // loop_pre_header
                _
              $region34: #{group_batch_norm_forward.1} parent=31 // loop_header
                %s96 = sphi 0, %s100
                %p97 = scmp.ge.s32.totalorder %s96, 1
                %s101 = sphi %s87, %s87
                %s102 = sphi %s84, %s84
              $region35: #{group_batch_norm_forward.1} parent=31 // loop_header_branch
                %99 = sbr.rel (%p97) target = $region39
              $region36: #{group_batch_norm_forward.1} parent=31 // loop_body
                %v103 = vld [vmem:[%s101] sm:$0xff]
                %104 = vst [vmem:[%s102] sm:$0xff] %v103
                %v105 = vld [vmem:[%s101 + $0x10] sm:$0xff]
                %106 = vst [vmem:[%s102 + $0x8] sm:$0xff] %v105
              $region37: #{group_batch_norm_forward.1} parent=31 // loop_footer
                %s100 = sadd.s32 1, %s96
              $region38: #{group_batch_norm_forward.1} parent=31 // loop_footer_branch
                %95 = sbr.rel target = $region34
              $region39: #{group_batch_norm_forward.1} parent=31 // loop_exit
                _
            $region32: #{group_batch_norm_forward.1} parent=23 // pred_fallthru
              _
          $region24: #{group_batch_norm_forward.1} parent=19 // pred_fallthru
            _
          %123 = vnop
        $region20: #{group_batch_norm_forward.1} parent=15 // pred_fallthru
          _
      $region16: #{group_batch_norm_forward.1} parent=5 // pred_fallthru
        _
      %p124 = scmp.le.s32.totalorder 1, %s7
      %p125 = scmp.lt.s32.totalorder %s7, 3
      %p126 = pnand %p124, %p125
      %p127 = pneg %p126
      // Predicated region
      $region55: #{group_batch_norm_forward.1} parent=5 // pred_check
        _
      $region56: #{group_batch_norm_forward.1} parent=5 // pred_check_branch
        %129 = sbr.rel (%p126) target = $region58
      $region57: #{group_batch_norm_forward.1} parent=5 // pred_region
        %s130 = ssub.s32 %s7, 1
        %s131 = sand.u32 %s20, 1
        %s132 = sand.u32 %s20, 1
        %s133 = smul.addr %s132, 16
        %s134 = scalar_lea.vmem [#allocation2], %s133
        // Predicated region
        $region59: #{group_batch_norm_forward.1} parent=57 // pred_check
          %p135 = pneg %p33
        $region60: #{group_batch_norm_forward.1} parent=57 // pred_check_branch
          %137 = sbr.rel (%p135) target = $region62
        $region61: #{group_batch_norm_forward.1} parent=57 // pred_region
          _
        $region62: #{group_batch_norm_forward.1} parent=57 // pred_fallthru
          _
        %s138 = sand.u32 %s20, 1
        %s139 = sand.u32 %s20, 1
        %s140 = smul.addr %s139, 16
        %s141 = scalar_lea.vmem [#allocation2], %s140
        %p142 = pneg %p33
        %p143 = pneg %p30
        %p144 = pneg %p59
        %p145 = pneg %p56
        %s146 = sand.u32 %s46, 1
        %s147 = sand.u32 %s46, 1
        %s148 = smul.addr %s147, 16
        %s149 = scalar_lea.vmem [#allocation3], %s148
        %v150 = vld [vmem:[%s134] sm:$0xff]
        %v151 = vld [vmem:[%s134 + $0x8] sm:$0xff]
        %v154 = vcombine.high %v150, %v150
        %v155 = vcombine.high %v151, %v151
        %vm158 = vcmask 1043456
        %v159 = vsel %vm158, %v150, 0.0
        %v160 = vsel %vm158, %v154, 0.0
        %v161 = vadd.f32 %v159, %v160
        %v162 = vsel %vm158, %v151, 0.0
        %v163 = vadd.f32 %v161, %v162
        %v164 = vsel %vm158, %v155, 0.0
        %v165 = vadd.f32 %v163, %v164
        %166 = vadd.xlane.f32.xlu0 %v165
        %v167 = vpop.xlane.xlu0 %166
        %v168 = vrot.slane %v167, 4
        %v169 = vadd.f32 %v167, %v168
        %v170 = vrot.slane %v169, 2
        %v171 = vadd.f32 %v169, %v170
        %v172 = vrot.slane %v171, 1
        %v173 = vadd.f32 %v171, %v172
        %s174 = vtos %v173
        %s175 = smul.f32 %s174, 0.00048828125
        %v176 = vstv %s175
        %v177 = vsub.f32 %v150, %v176
        %v178 = vsub.f32 %v151, %v176
        %v179 = vmul.f32 %v177, %v177
        %v180 = vmul.f32 %v178, %v178
        %v183 = vcombine.high %v179, %v179
        %v184 = vcombine.high %v180, %v180
        %v187 = vsel %vm158, %v179, 0.0
        %v188 = vsel %vm158, %v183, 0.0
        %v189 = vadd.f32 %v187, %v188
        %v190 = vsel %vm158, %v180, 0.0
        %v191 = vadd.f32 %v189, %v190
        %v192 = vsel %vm158, %v184, 0.0
        %v193 = vadd.f32 %v191, %v192
        %194 = vadd.xlane.f32.xlu0 %v193
        %v195 = vpop.xlane.xlu0 %194
        %v196 = vrot.slane %v195, 4
        %v197 = vadd.f32 %v195, %v196
        %v198 = vrot.slane %v197, 2
        %v199 = vadd.f32 %v197, %v198
        %v200 = vrot.slane %v199, 1
        %v201 = vadd.f32 %v199, %v200
        %s202 = vtos %v201
        %s203 = smul.f32 %s202, 0.00048828125
        %s204 = sadd.f32 %s203, 1e-05
        %v205 = vstv %s204
        %v206 = vrsqrt.pop %v205
        %s207 = vtos %v206
        %v208 = vstv %s207
        %v209 = vmul.f32 %v177, %v208
        %v210 = vmul.f32 %v178, %v208
        %211 = vst [vmem:[%s149] sm:$0xff] %v209
        %212 = vst [vmem:[%s149 + $0x8] sm:$0xff] %v210
        %s213 = sand.u32 %s46, 1
        %s214 = sand.u32 %s46, 1
        %s215 = smul.addr %s214, 16
        %s216 = scalar_lea.vmem [#allocation3], %s215
        // Predicated region
        $region63: #{group_batch_norm_forward.1} parent=57 // pred_check
          %p217 = pneg %p56
        $region64: #{group_batch_norm_forward.1} parent=57 // pred_check_branch
          %219 = sbr.rel (%p217) target = $region66
        $region65: #{group_batch_norm_forward.1} parent=57 // pred_region
          %s220 = smul.addr %s12, 2
          %s221 = smul.addr %s220, 4
          %s222 = scalar_lea.vmem %s1, %s221
          // Predicated region
          $region67: #{group_batch_norm_forward.1} parent=65 // pred_check
            _
          $region68: #{group_batch_norm_forward.1} parent=65 // pred_check_branch
            %224 = sbr.rel (0) target = $region70
          $region69: #{group_batch_norm_forward.1} parent=65 // pred_region
            // Predicated region
            $region71: #{group_batch_norm_forward.1} parent=69 // pred_check
              _
            $region72: #{group_batch_norm_forward.1} parent=69 // pred_check_branch
              %226 = sbr.rel (0) target = $region74
            $region73: #{group_batch_norm_forward.1} parent=69 // pred_region
              // Predicated region
              $region86: #{group_batch_norm_forward.1} parent=73 // pred_check
                _
              $region87: #{group_batch_norm_forward.1} parent=73 // pred_check_branch
                %243 = sbr.rel (0) target = $region89
              $region88: #{group_batch_norm_forward.1} parent=73 // pred_region
                loop: start=0, step=1, limit=1
                $region90: #{group_batch_norm_forward.1} parent=88 // loop_pre_header
                  _
                $region91: #{group_batch_norm_forward.1} parent=88 // loop_header
                  %s245 = sphi 0, %s249
                  %p246 = scmp.ge.s32.totalorder %s245, 1
                  %s250 = sphi %s216, %s216
                  %s251 = sphi %s222, %s222
                $region92: #{group_batch_norm_forward.1} parent=88 // loop_header_branch
                  %248 = sbr.rel (%p246) target = $region96
                $region93: #{group_batch_norm_forward.1} parent=88 // loop_body
                  %v252 = vld [vmem:[%s250] sm:$0xff]
                  %253 = vst [vmem:[%s251] sm:$0xff] %v252
                  %v254 = vld [vmem:[%s250 + $0x8] sm:$0xff]
                  %255 = vst [vmem:[%s251 + $0x10] sm:$0xff] %v254
                $region94: #{group_batch_norm_forward.1} parent=88 // loop_footer
                  %s249 = sadd.s32 1, %s245
                $region95: #{group_batch_norm_forward.1} parent=88 // loop_footer_branch
                  %244 = sbr.rel target = $region91
                $region96: #{group_batch_norm_forward.1} parent=88 // loop_exit
                  _
              $region89: #{group_batch_norm_forward.1} parent=73 // pred_fallthru
                _
              // Predicated region
              $region97: #{group_batch_norm_forward.1} parent=73 // pred_check
                _
              $region98: #{group_batch_norm_forward.1} parent=73 // pred_check_branch
                %257 = sbr.rel target = $region100
              $region99: #{group_batch_norm_forward.1} parent=73 // pred_region
                _
              $region100: #{group_batch_norm_forward.1} parent=73 // pred_fallthru
                _
            $region74: #{group_batch_norm_forward.1} parent=69 // pred_fallthru
              _
            // Predicated region
            $region75: #{group_batch_norm_forward.1} parent=69 // pred_check
              _
            $region76: #{group_batch_norm_forward.1} parent=69 // pred_check_branch
              %228 = sbr.rel target = $region78
            $region77: #{group_batch_norm_forward.1} parent=69 // pred_region
              loop: start=0, step=1, limit=1
              $region79: #{group_batch_norm_forward.1} parent=77 // loop_pre_header
                _
              $region80: #{group_batch_norm_forward.1} parent=77 // loop_header
                %s231 = sphi 0, %s235
                %p232 = scmp.ge.s32.totalorder %s231, 1
                %s236 = sphi %s216, %s216
                %s237 = sphi %s222, %s222
              $region81: #{group_batch_norm_forward.1} parent=77 // loop_header_branch
                %234 = sbr.rel (%p232) target = $region85
              $region82: #{group_batch_norm_forward.1} parent=77 // loop_body
                %v238 = vld [vmem:[%s236] sm:$0xff]
                %239 = vst [vmem:[%s237] sm:$0xff] %v238
                %v240 = vld [vmem:[%s236 + $0x8] sm:$0xff]
                %241 = vst [vmem:[%s237 + $0x10] sm:$0xff] %v240
              $region83: #{group_batch_norm_forward.1} parent=77 // loop_footer
                %s235 = sadd.s32 1, %s231
              $region84: #{group_batch_norm_forward.1} parent=77 // loop_footer_branch
                %230 = sbr.rel target = $region80
              $region85: #{group_batch_norm_forward.1} parent=77 // loop_exit
                _
            $region78: #{group_batch_norm_forward.1} parent=69 // pred_fallthru
              _
          $region70: #{group_batch_norm_forward.1} parent=65 // pred_fallthru
            _
          %258 = vnop
        $region66: #{group_batch_norm_forward.1} parent=57 // pred_fallthru
          _
      $region58: #{group_batch_norm_forward.1} parent=5 // pred_fallthru
        _
      %p259 = scmp.le.s32.totalorder 2, %s7
      // Predicated region
      $region101: #{group_batch_norm_forward.1} parent=5 // pred_check
        %p260 = pneg %p259
      $region102: #{group_batch_norm_forward.1} parent=5 // pred_check_branch
        %262 = sbr.rel (%p260) target = $region104
      $region103: #{group_batch_norm_forward.1} parent=5 // pred_region
        %s263 = ssub.s32 %s7, 2
        // Predicated region
        $region105: #{group_batch_norm_forward.1} parent=103 // pred_check
          %p264 = pneg %p62
        $region106: #{group_batch_norm_forward.1} parent=103 // pred_check_branch
          %266 = sbr.rel (%p264) target = $region108
        $region107: #{group_batch_norm_forward.1} parent=103 // pred_region
          %s267 = sand.u32 %s47, 1
          %s268 = sand.u32 %s47, 1
          %s269 = smul.addr %s268, 16
          %s270 = scalar_lea.vmem [#allocation3], %s269
        $region108: #{group_batch_norm_forward.1} parent=103 // pred_fallthru
          _
      $region104: #{group_batch_norm_forward.1} parent=5 // pred_fallthru
        _
    $region6: #{group_batch_norm_forward.1} parent=1 // loop_footer
      %s11 = sadd.s32 1, %s7
    $region7: #{group_batch_norm_forward.1} parent=1 // loop_footer_branch
      %6 = sbr.rel target = $region3
    $region8: #{group_batch_norm_forward.1} parent=1 // loop_exit
      _

</llo_original>
